<compile_context>
chip_gen: v7x
topology: tpu7x:2x2x1
jax: 0.10.0
libtpu: 0.0.40
codegen_flags: <defaults>
</compile_context>

<pallas_src>
import functools

import jax
import jax.numpy as jnp
from jax import lax
from jax.experimental import pallas as pl
from jax.experimental.pallas import tpu as pltpu

SMOOTH = 1e-06
_LANES = 128
_MIN_TILE_ROWS = 32                    # int8 labels: (32, 128) minimum tile
_MAX_TILE_ROWS = 8192
_STEP_BYTES_BUDGET = 6 * 1024 * 1024   # per-grid-step block bytes (x2 double buffer)
_VMEM_LIMIT_BYTES = 32 * 1024 * 1024   # safe on v5e/v6e/v7x, covers 2 inputs x 2 bufs


def _dice_sums_kernel(x_ref, t_ref, out_ref, acc_ref, *,
                      num_classes, hw, blocks_per_split):
    # x_ref:   (1, C, R, 128)  class scores, native dtype (cast to f32 here)
    # t_ref:   (1, R, 128)     int8 labels (widened to int32 here)
    # out_ref: (1, 1, 3, C)    f32 per-(split, batch) [num, den1, den2] totals
    # acc_ref: (3, C, 8, 128)  f32 running partial sums (VALU-only strip adds)
    s = pl.program_id(0)
    r = pl.program_id(2)

    @pl.when(r == 0)
    def _init():
        acc_ref[...] = jnp.zeros_like(acc_ref)

    R = x_ref.shape[2]
    nstrips = R // 8

    # Global pixel index of every element of this tile.  Masks (a) the sub-128
    # pad tail, (b) the partial trailing row-block (OOB reads are garbage but
    # selected away), (c) any fully out-of-range block of the split axis.
    gb = s * blocks_per_split + r                       # UNclamped global block id
    row_iota = lax.broadcasted_iota(jnp.int32, (R, _LANES), 0)
    lane_iota = lax.broadcasted_iota(jnp.int32, (R, _LANES), 1)
    pix = (gb * R + row_iota) * _LANES + lane_iota
    valid = pix < hw                                    # (R, 128) bool

    t = t_ref[0].astype(jnp.int32)                      # int8 -> int32 after load

    if num_classes == 2:
        # softmax over 2 classes == sigmoid of the logit difference (1 exp/pixel)
        x0 = x_ref[0, 0].astype(jnp.float32)
        x1 = x_ref[0, 1].astype(jnp.float32)
        p1 = 1.0 / (1.0 + jnp.exp(x0 - x1))
        probs = [1.0 - p1, p1]                          # no stacked intermediate
    else:
        xs = [x_ref[0, c].astype(jnp.float32) for c in range(num_classes)]
        m = xs[0]
        for xc in xs[1:]:
            m = jnp.maximum(m, xc)
        es = [jnp.exp(xc - m) for xc in xs]
        tot = es[0]
        for ec in es[1:]:
            tot = tot + ec
        inv = 1.0 / tot
        probs = [ec * inv for ec in es]

    def strip_sum(v):
        # (R, 128) -> (8, 128): pure vreg adds; XLU reduce is deferred to finalize.
        return jnp.sum(v.reshape(nstrips, 8, _LANES), axis=0)

    for c in range(num_classes):
        p_c = probs[c]
        hit = jnp.logical_and(valid, t == c)
        acc_ref[0, c, :, :] += strip_sum(jnp.where(hit, p_c, 0.0))     # num
        acc_ref[1, c, :, :] += strip_sum(jnp.where(valid, p_c, 0.0))   # den1
        acc_ref[2, c, :, :] += strip_sum(jnp.where(hit, 1.0, 0.0))     # den2

    @pl.when(r == pl.num_programs(2) - 1)
    def _finalize():
        acc = acc_ref[...]                              # (3, C, 8, 128)
        totals = jnp.sum(jnp.sum(acc, axis=-1), axis=-1)   # (3, C), one XLU pass
        out_ref[...] = totals.reshape(1, 1, 3, num_classes)


def _choose_tile_rows(rows_arr, num_classes, x_itemsize):
    """Largest 32-multiple row tile within the per-step byte budget and array."""
    bytes_per_row = (num_classes * x_itemsize + 1) * _LANES   # scores + int8 labels
    budget_rows = (_STEP_BYTES_BUDGET // bytes_per_row) // _MIN_TILE_ROWS * _MIN_TILE_ROWS
    tile = max(_MIN_TILE_ROWS, min(_MAX_TILE_ROWS, budget_rows))
    if tile > rows_arr:                                  # never exceed the array dim
        tile = max(_MIN_TILE_ROWS, (rows_arr // _MIN_TILE_ROWS) * _MIN_TILE_ROWS)
    return tile


def dice_loss_integer(input_, target, C=2):
    """input_: (B, C, H, W) float class scores; target: (B, 1, H, W) int labels."""
    B, Cc, H, W = input_.shape
    assert Cc == C, "channel count mismatch"
    assert target.shape == (B, 1, H, W), "target must be B x 1 x H x W integer labels"
    HW = H * W

    rows = pl.cdiv(HW, _LANES)
    rows_arr = max(rows, _MIN_TILE_ROWS)
    HW_arr = rows_arr * _LANES

    x3 = input_.reshape(B, C, HW)                 # native dtype, no f32 upcast copy
    t2 = target.reshape(B, HW).astype(jnp.int8)   # int8 labels: 4x fewer label bytes
    if HW_arr != HW:
        # Only when HW % 128 != 0 (or tiny inputs): pad pixel axis to a lane
        # multiple for the (rows, 128) view.  Tile-level raggedness is handled
        # in-kernel (partial trailing blocks + index masking), never padded here.
        x3 = jnp.pad(x3, ((0, 0), (0, 0), (0, HW_arr - HW)))
        t2 = jnp.pad(t2, ((0, 0), (0, HW_arr - HW)))
    x4 = x3.reshape(B, C, rows_arr, _LANES)       # lane-dense pixel slabs
    t3 = t2.reshape(B, rows_arr, _LANES)

    tile_rows = _choose_tile_rows(rows_arr, C, x4.dtype.itemsize)
    total_blocks = pl.cdiv(rows_arr, tile_rows)

    # v7x has 2 TensorCores: with B == 1 the batch axis alone can't use both, so
    # split the row-block axis into two parallel halves, combined in the epilogue.
    num_splits = 2 if (B == 1 and total_blocks >= 2) else 1
    blocks_per_split = pl.cdiv(total_blocks, num_splits)

    def x_map(s, b, r):
        gb = jnp.minimum(s * blocks_per_split + r, total_blocks - 1)  # stay in-bounds
        return (b, 0, gb, 0)

    def t_map(s, b, r):
        gb = jnp.minimum(s * blocks_per_split + r, total_blocks - 1)
        return (b, gb, 0)

    kernel = functools.partial(_dice_sums_kernel, num_classes=C, hw=HW,
                               blocks_per_split=blocks_per_split)

    cost = pl.CostEstimate(
        flops=10 * B * C * HW_arr,
        transcendentals=B * HW_arr * (1 if C == 2 else C),
        bytes_accessed=B * HW_arr * (C * x4.dtype.itemsize + 1)
                       + num_splits * B * 3 * C * 4,
    )

    sums = pl.pallas_call(
        kernel,
        out_shape=jax.ShapeDtypeStruct((num_splits, B, 3, C), jnp.float32),
        grid=(num_splits, B, blocks_per_split),
        in_specs=[
            pl.BlockSpec((1, C, tile_rows, _LANES), x_map),
            pl.BlockSpec((1, tile_rows, _LANES), t_map),
        ],
        out_specs=pl.BlockSpec((1, 1, 3, C), lambda s, b, r: (s, b, 0, 0)),
        scratch_shapes=[pltpu.VMEM((3, C, 8, _LANES), jnp.float32)],
        compiler_params=pltpu.CompilerParams(
            dimension_semantics=("parallel", "parallel", "arbitrary"),
            vmem_limit_bytes=_VMEM_LIMIT_BYTES),
        cost_estimate=cost,
    )(x4, t3)

    # tiny epilogue in plain JAX (matches the PyTorch tail exactly)
    totals = jnp.sum(sums, axis=0)                             # (B, 3, C)
    num, den1, den2 = totals[:, 0], totals[:, 1], totals[:, 2]
    dice = (2.0 * num + SMOOTH) / (den1 + den2 + SMOOTH)        # (B, C)
    dice_eso = dice[:, 1:]                                      # drop class 0
    dice_eso = jnp.where(jnp.isnan(dice_eso), 1.0, dice_eso)    # NaN -> 1.0
    dice_total = -1.0 * jnp.sum(dice_eso) / dice_eso.shape[0]
    return 1.0 - dice_total


def _reference(input_, target, C=2):
    """Pure-JAX reference mirroring the PyTorch forward."""
    onehot = jax.nn.one_hot(target[:, 0], C, axis=1, dtype=jnp.float32)
    probs = jax.nn.softmax(input_.astype(jnp.float32), axis=1)
    num = jnp.sum(probs * onehot, axis=(2, 3))
    den1 = jnp.sum(probs, axis=(2, 3))
    den2 = jnp.sum(onehot, axis=(2, 3))
    dice = (2.0 * num + SMOOTH) / (den1 + den2 + SMOOTH)
    dice_eso = dice[:, 1:]
    dice_eso = jnp.where(jnp.isnan(dice_eso), 1.0, dice_eso)
    dice_total = -1.0 * jnp.sum(dice_eso) / dice_eso.shape[0]
    return 1.0 - dice_total


if __name__ == "__main__":
    key = jax.random.PRNGKey(0)
    ks = jax.random.split(key, 8)

    def _check(scores, labels, C):
        out = jax.block_until_ready(dice_loss_integer(scores, labels, C=C))
        ref = _reference(scores, labels, C=C)
        assert jnp.allclose(out, ref, rtol=1e-4, atol=1e-5), (out, ref)

    # 1) basic C=2 (sigmoid path), HW multiple of 128
    s1 = jax.random.normal(ks[0], (2, 2, 16, 16), dtype=jnp.float32)
    l1 = jax.random.randint(ks[1], (2, 1, 16, 16), 0, 2, dtype=jnp.int32)
    _check(s1, l1, 2)

    # 2) ragged HW (HW % 128 != 0 -> lane-pad path + index masking)
    s2 = jax.random.normal(ks[2], (2, 2, 12, 12), dtype=jnp.float32)
    l2 = jax.random.randint(ks[3], (2, 1, 12, 12), 0, 2, dtype=jnp.int32)
    _check(s2, l2, 2)

    # 3) B == 1 -> two-way row-block split (both v7x cores) + partial trailing block
    s3 = jax.random.normal(ks[4], (1, 2, 48, 96), dtype=jnp.float32)
    l3 = jax.random.randint(ks[5], (1, 1, 48, 96), 0, 2, dtype=jnp.int32)
    _check(s3, l3, 2)

    # 4) general C (stable softmax path)
    s4 = jax.random.normal(ks[6], (2, 4, 16, 16), dtype=jnp.float32)
    l4 = jax.random.randint(ks[7], (2, 1, 16, 16), 0, 4, dtype=jnp.int32)
    _check(s4, l4, 4)

    print("KERNEL_OK")
</pallas_src>

<mosaic_0001>
module attributes {stable_mosaic.version = 11 : i64} {
  func.func @_dice_sums_kernel(%arg0: i32, %arg1: i32, %arg2: i32, %arg3: memref<1x2x32x128xf32, #tpu.memory_space<vmem>>, %arg4: memref<1x32x128xi8, #tpu.memory_space<vmem>>, %arg5: memref<1x1x3x2xf32, #tpu.memory_space<vmem>>, %arg6: memref<3x2x8x128xf32, #tpu.memory_space<vmem>>) attributes {dimension_semantics = [#tpu.dimension_semantics<parallel>, #tpu.dimension_semantics<parallel>, #tpu.dimension_semantics<arbitrary>], iteration_bounds = array<i64: 1, 2, 1>, scalar_prefetch = 0 : i64, scratch_operands = 1 : i64, tpu.core_type = #tpu.core_type<tc>, window_params = [{transform_indices = @transform_0, window_bounds = array<i64: 1, 2, 32, 128>}, {transform_indices = @transform_1, window_bounds = array<i64: 1, 32, 128>}, {transform_indices = @transform_2, window_bounds = array<i64: 1, 1, 3, 2>}]} {
    %c0_i32 = arith.constant 0 : i32
    %0 = arith.cmpi eq, %arg2, %c0_i32 : i32
    %1 = arith.extui %0 : i1 to i32
    %c0_i32_0 = arith.constant 0 : i32
    %2 = arith.cmpi ne, %1, %c0_i32_0 : i32
    scf.if %2 {
      %cst_77 = arith.constant 0.000000e+00 : f32
      %101 = vector.broadcast %cst_77 : f32 to vector<3x2x8x128xf32>
      %c0_78 = arith.constant 0 : index
      %c0_79 = arith.constant 0 : index
      %c0_80 = arith.constant 0 : index
      %c0_81 = arith.constant 0 : index
      %102 = vector.load %arg6[%c0_78, %c0_79, %c0_80, %c0_81] : memref<3x2x8x128xf32, #tpu.memory_space<vmem>>, vector<3x2x8x128xf32>
      tpu.vector_store %arg6[%c0_78, %c0_79, %c0_80, %c0_81], %101 {strides = array<i32>} : memref<3x2x8x128xf32, #tpu.memory_space<vmem>>, vector<3x2x8x128xf32>,
    } else {
    }
    %c1_i32 = arith.constant 1 : i32
    %3 = arith.muli %arg0, %c1_i32 : i32
    %4 = arith.addi %3, %arg2 : i32
    %5 = tpu.iota {dimensions = array<i32: 0>} : vector<32x128xi32>
    %6 = tpu.iota {dimensions = array<i32: 1>} : vector<32x128xi32>
    %c32_i32 = arith.constant 32 : i32
    %7 = arith.muli %4, %c32_i32 : i32
    %8 = vector.broadcast %7 : i32 to vector<32x128xi32>
    %9 = arith.addi %8, %5 : vector<32x128xi32>
    %c128_i32 = arith.constant 128 : i32
    %10 = vector.broadcast %c128_i32 : i32 to vector<32x128xi32>
    %11 = arith.muli %9, %10 : vector<32x128xi32>
    %12 = arith.addi %11, %6 : vector<32x128xi32>
    %c256_i32 = arith.constant 256 : i32
    %13 = vector.broadcast %c256_i32 : i32 to vector<32x128xi32>
    %14 = arith.cmpi slt, %12, %13 : vector<32x128xi32>
    %c0 = arith.constant 0 : index
    %c0_1 = arith.constant 0 : index
    %c0_2 = arith.constant 0 : index
    %15 = vector.load %arg4[%c0, %c0_1, %c0_2] : memref<1x32x128xi8, #tpu.memory_space<vmem>>, vector<1x32x128xi8>
    %16 = vector.shape_cast %15 : vector<1x32x128xi8> to vector<32x128xi8>
    %17 = arith.extsi %16 : vector<32x128xi8> to vector<32x128xi32>
    %c0_3 = arith.constant 0 : index
    %c0_4 = arith.constant 0 : index
    %c0_5 = arith.constant 0 : index
    %c0_6 = arith.constant 0 : index
    %18 = vector.load %arg3[%c0_3, %c0_4, %c0_5, %c0_6] : memref<1x2x32x128xf32, #tpu.memory_space<vmem>>, vector<1x1x32x128xf32>
    %19 = vector.shape_cast %18 : vector<1x1x32x128xf32> to vector<32x128xf32>
    %c0_7 = arith.constant 0 : index
    %c1 = arith.constant 1 : index
    %c0_8 = arith.constant 0 : index
    %c0_9 = arith.constant 0 : index
    %20 = vector.load %arg3[%c0_7, %c1, %c0_8, %c0_9] : memref<1x2x32x128xf32, #tpu.memory_space<vmem>>, vector<1x1x32x128xf32>
    %21 = vector.shape_cast %20 : vector<1x1x32x128xf32> to vector<32x128xf32>
    %22 = arith.subf %19, %21 : vector<32x128xf32>
    %23 = math.exp %22 : vector<32x128xf32>
    %cst = arith.constant 1.000000e+00 : f32
    %24 = vector.broadcast %cst : f32 to vector<32x128xf32>
    %25 = arith.addf %24, %23 : vector<32x128xf32>
    %cst_10 = arith.constant 1.000000e+00 : f32
    %26 = vector.broadcast %cst_10 : f32 to vector<32x128xf32>
    %27 = arith.divf %26, %25 : vector<32x128xf32>
    %cst_11 = arith.constant 1.000000e+00 : f32
    %28 = vector.broadcast %cst_11 : f32 to vector<32x128xf32>
    %29 = arith.subf %28, %27 : vector<32x128xf32>
    %c0_i32_12 = arith.constant 0 : i32
    %30 = vector.broadcast %c0_i32_12 : i32 to vector<32x128xi32>
    %31 = arith.cmpi eq, %17, %30 : vector<32x128xi32>
    %32 = arith.andi %14, %31 : vector<32x128xi1>
    %c0_13 = arith.constant 0 : index
    %c0_14 = arith.constant 0 : index
    %c0_15 = arith.constant 0 : index
    %c0_16 = arith.constant 0 : index
    %33 = vector.load %arg6[%c0_13, %c0_14, %c0_15, %c0_16] : memref<3x2x8x128xf32, #tpu.memory_space<vmem>>, vector<1x1x8x128xf32>
    %34 = vector.shape_cast %33 : vector<1x1x8x128xf32> to vector<8x128xf32>
    %cst_17 = arith.constant 0.000000e+00 : f32
    %35 = vector.broadcast %cst_17 : f32 to vector<32x128xf32>
    %36 = arith.select %32, %29, %35 : vector<32x128xi1>, vector<32x128xf32>
    %37 = vector.shape_cast %36 : vector<32x128xf32> to vector<4x8x128xf32>
    %cst_18 = arith.constant dense<0.000000e+00> : vector<8x128xf32>
    %38 = vector.multi_reduction <add>, %37, %cst_18 [0] : vector<4x8x128xf32> to vector<8x128xf32>
    %39 = arith.addf %34, %38 : vector<8x128xf32>
    %c0_19 = arith.constant 0 : index
    %c0_20 = arith.constant 0 : index
    %c0_21 = arith.constant 0 : index
    %c0_22 = arith.constant 0 : index
    %40 = vector.load %arg6[%c0_19, %c0_20, %c0_21, %c0_22] : memref<3x2x8x128xf32, #tpu.memory_space<vmem>>, vector<1x1x8x128xf32>
    %41 = vector.shape_cast %40 : vector<1x1x8x128xf32> to vector<8x128xf32>
    %42 = vector.shape_cast %39 : vector<8x128xf32> to vector<1x1x8x128xf32>
    tpu.vector_store %arg6[%c0_19, %c0_20, %c0_21, %c0_22], %42 {strides = array<i32>} : memref<3x2x8x128xf32, #tpu.memory_space<vmem>>, vector<1x1x8x128xf32>,
    %c1_23 = arith.constant 1 : index
    %c0_24 = arith.constant 0 : index
    %c0_25 = arith.constant 0 : index
    %c0_26 = arith.constant 0 : index
    %43 = vector.load %arg6[%c1_23, %c0_24, %c0_25, %c0_26] : memref<3x2x8x128xf32, #tpu.memory_space<vmem>>, vector<1x1x8x128xf32>
    %44 = vector.shape_cast %43 : vector<1x1x8x128xf32> to vector<8x128xf32>
    %cst_27 = arith.constant 0.000000e+00 : f32
    %45 = vector.broadcast %cst_27 : f32 to vector<32x128xf32>
    %46 = arith.select %14, %29, %45 : vector<32x128xi1>, vector<32x128xf32>
    %47 = vector.shape_cast %46 : vector<32x128xf32> to vector<4x8x128xf32>
    %cst_28 = arith.constant dense<0.000000e+00> : vector<8x128xf32>
    %48 = vector.multi_reduction <add>, %47, %cst_28 [0] : vector<4x8x128xf32> to vector<8x128xf32>
    %49 = arith.addf %44, %48 : vector<8x128xf32>
    %c1_29 = arith.constant 1 : index
    %c0_30 = arith.constant 0 : index
    %c0_31 = arith.constant 0 : index
    %c0_32 = arith.constant 0 : index
    %50 = vector.load %arg6[%c1_29, %c0_30, %c0_31, %c0_32] : memref<3x2x8x128xf32, #tpu.memory_space<vmem>>, vector<1x1x8x128xf32>
    %51 = vector.shape_cast %50 : vector<1x1x8x128xf32> to vector<8x128xf32>
    %52 = vector.shape_cast %49 : vector<8x128xf32> to vector<1x1x8x128xf32>
    tpu.vector_store %arg6[%c1_29, %c0_30, %c0_31, %c0_32], %52 {strides = array<i32>} : memref<3x2x8x128xf32, #tpu.memory_space<vmem>>, vector<1x1x8x128xf32>,
    %c2 = arith.constant 2 : index
    %c0_33 = arith.constant 0 : index
    %c0_34 = arith.constant 0 : index
    %c0_35 = arith.constant 0 : index
    %53 = vector.load %arg6[%c2, %c0_33, %c0_34, %c0_35] : memref<3x2x8x128xf32, #tpu.memory_space<vmem>>, vector<1x1x8x128xf32>
    %54 = vector.shape_cast %53 : vector<1x1x8x128xf32> to vector<8x128xf32>
    %cst_36 = arith.constant 1.000000e+00 : f32
    %cst_37 = arith.constant 0.000000e+00 : f32
    %55 = vector.broadcast %cst_36 : f32 to vector<32x128xf32>
    %56 = vector.broadcast %cst_37 : f32 to vector<32x128xf32>
    %57 = arith.select %32, %55, %56 : vector<32x128xi1>, vector<32x128xf32>
    %58 = vector.shape_cast %57 : vector<32x128xf32> to vector<4x8x128xf32>
    %cst_38 = arith.constant dense<0.000000e+00> : vector<8x128xf32>
    %59 = vector.multi_reduction <add>, %58, %cst_38 [0] : vector<4x8x128xf32> to vector<8x128xf32>
    %60 = arith.addf %54, %59 : vector<8x128xf32>
    %c2_39 = arith.constant 2 : index
    %c0_40 = arith.constant 0 : index
    %c0_41 = arith.constant 0 : index
    %c0_42 = arith.constant 0 : index
    %61 = vector.load %arg6[%c2_39, %c0_40, %c0_41, %c0_42] : memref<3x2x8x128xf32, #tpu.memory_space<vmem>>, vector<1x1x8x128xf32>
    %62 = vector.shape_cast %61 : vector<1x1x8x128xf32> to vector<8x128xf32>
    %63 = vector.shape_cast %60 : vector<8x128xf32> to vector<1x1x8x128xf32>
    tpu.vector_store %arg6[%c2_39, %c0_40, %c0_41, %c0_42], %63 {strides = array<i32>} : memref<3x2x8x128xf32, #tpu.memory_space<vmem>>, vector<1x1x8x128xf32>,
    %c1_i32_43 = arith.constant 1 : i32
    %64 = vector.broadcast %c1_i32_43 : i32 to vector<32x128xi32>
    %65 = arith.cmpi eq, %17, %64 : vector<32x128xi32>
    %66 = arith.andi %14, %65 : vector<32x128xi1>
    %c0_44 = arith.constant 0 : index
    %c1_45 = arith.constant 1 : index
    %c0_46 = arith.constant 0 : index
    %c0_47 = arith.constant 0 : index
    %67 = vector.load %arg6[%c0_44, %c1_45, %c0_46, %c0_47] : memref<3x2x8x128xf32, #tpu.memory_space<vmem>>, vector<1x1x8x128xf32>
    %68 = vector.shape_cast %67 : vector<1x1x8x128xf32> to vector<8x128xf32>
    %cst_48 = arith.constant 0.000000e+00 : f32
    %69 = vector.broadcast %cst_48 : f32 to vector<32x128xf32>
    %70 = arith.select %66, %27, %69 : vector<32x128xi1>, vector<32x128xf32>
    %71 = vector.shape_cast %70 : vector<32x128xf32> to vector<4x8x128xf32>
    %cst_49 = arith.constant dense<0.000000e+00> : vector<8x128xf32>
    %72 = vector.multi_reduction <add>, %71, %cst_49 [0] : vector<4x8x128xf32> to vector<8x128xf32>
    %73 = arith.addf %68, %72 : vector<8x128xf32>
    %c0_50 = arith.constant 0 : index
    %c1_51 = arith.constant 1 : index
    %c0_52 = arith.constant 0 : index
    %c0_53 = arith.constant 0 : index
    %74 = vector.load %arg6[%c0_50, %c1_51, %c0_52, %c0_53] : memref<3x2x8x128xf32, #tpu.memory_space<vmem>>, vector<1x1x8x128xf32>
    %75 = vector.shape_cast %74 : vector<1x1x8x128xf32> to vector<8x128xf32>
    %76 = vector.shape_cast %73 : vector<8x128xf32> to vector<1x1x8x128xf32>
    tpu.vector_store %arg6[%c0_50, %c1_51, %c0_52, %c0_53], %76 {strides = array<i32>} : memref<3x2x8x128xf32, #tpu.memory_space<vmem>>, vector<1x1x8x128xf32>,
    %c1_54 = arith.constant 1 : index
    %c1_55 = arith.constant 1 : index
    %c0_56 = arith.constant 0 : index
    %c0_57 = arith.constant 0 : index
    %77 = vector.load %arg6[%c1_54, %c1_55, %c0_56, %c0_57] : memref<3x2x8x128xf32, #tpu.memory_space<vmem>>, vector<1x1x8x128xf32>
    %78 = vector.shape_cast %77 : vector<1x1x8x128xf32> to vector<8x128xf32>
    %cst_58 = arith.constant 0.000000e+00 : f32
    %79 = vector.broadcast %cst_58 : f32 to vector<32x128xf32>
    %80 = arith.select %14, %27, %79 : vector<32x128xi1>, vector<32x128xf32>
    %81 = vector.shape_cast %80 : vector<32x128xf32> to vector<4x8x128xf32>
    %cst_59 = arith.constant dense<0.000000e+00> : vector<8x128xf32>
    %82 = vector.multi_reduction <add>, %81, %cst_59 [0] : vector<4x8x128xf32> to vector<8x128xf32>
    %83 = arith.addf %78, %82 : vector<8x128xf32>
    %c1_60 = arith.constant 1 : index
    %c1_61 = arith.constant 1 : index
    %c0_62 = arith.constant 0 : index
    %c0_63 = arith.constant 0 : index
    %84 = vector.load %arg6[%c1_60, %c1_61, %c0_62, %c0_63] : memref<3x2x8x128xf32, #tpu.memory_space<vmem>>, vector<1x1x8x128xf32>
    %85 = vector.shape_cast %84 : vector<1x1x8x128xf32> to vector<8x128xf32>
    %86 = vector.shape_cast %83 : vector<8x128xf32> to vector<1x1x8x128xf32>
    tpu.vector_store %arg6[%c1_60, %c1_61, %c0_62, %c0_63], %86 {strides = array<i32>} : memref<3x2x8x128xf32, #tpu.memory_space<vmem>>, vector<1x1x8x128xf32>,
    %c2_64 = arith.constant 2 : index
    %c1_65 = arith.constant 1 : index
    %c0_66 = arith.constant 0 : index
    %c0_67 = arith.constant 0 : index
    %87 = vector.load %arg6[%c2_64, %c1_65, %c0_66, %c0_67] : memref<3x2x8x128xf32, #tpu.memory_space<vmem>>, vector<1x1x8x128xf32>
    %88 = vector.shape_cast %87 : vector<1x1x8x128xf32> to vector<8x128xf32>
    %cst_68 = arith.constant 1.000000e+00 : f32
    %cst_69 = arith.constant 0.000000e+00 : f32
    %89 = vector.broadcast %cst_68 : f32 to vector<32x128xf32>
    %90 = vector.broadcast %cst_69 : f32 to vector<32x128xf32>
    %91 = arith.select %66, %89, %90 : vector<32x128xi1>, vector<32x128xf32>
    %92 = vector.shape_cast %91 : vector<32x128xf32> to vector<4x8x128xf32>
    %cst_70 = arith.constant dense<0.000000e+00> : vector<8x128xf32>
    %93 = vector.multi_reduction <add>, %92, %cst_70 [0] : vector<4x8x128xf32> to vector<8x128xf32>
    %94 = arith.addf %88, %93 : vector<8x128xf32>
    %c2_71 = arith.constant 2 : index
    %c1_72 = arith.constant 1 : index
    %c0_73 = arith.constant 0 : index
    %c0_74 = arith.constant 0 : index
    %95 = vector.load %arg6[%c2_71, %c1_72, %c0_73, %c0_74] : memref<3x2x8x128xf32, #tpu.memory_space<vmem>>, vector<1x1x8x128xf32>
    %96 = vector.shape_cast %95 : vector<1x1x8x128xf32> to vector<8x128xf32>
    %97 = vector.shape_cast %94 : vector<8x128xf32> to vector<1x1x8x128xf32>
    tpu.vector_store %arg6[%c2_71, %c1_72, %c0_73, %c0_74], %97 {strides = array<i32>} : memref<3x2x8x128xf32, #tpu.memory_space<vmem>>, vector<1x1x8x128xf32>,
    %c0_i32_75 = arith.constant 0 : i32
    %98 = arith.cmpi eq, %arg2, %c0_i32_75 : i32
    %99 = arith.extui %98 : i1 to i32
    %c0_i32_76 = arith.constant 0 : i32
    %100 = arith.cmpi ne, %99, %c0_i32_76 : i32
    scf.if %100 {
      %c0_77 = arith.constant 0 : index
      %c0_78 = arith.constant 0 : index
      %c0_79 = arith.constant 0 : index
      %c0_80 = arith.constant 0 : index
      %101 = vector.load %arg6[%c0_77, %c0_78, %c0_79, %c0_80] : memref<3x2x8x128xf32, #tpu.memory_space<vmem>>, vector<3x2x8x128xf32>
      %cst_81 = arith.constant dense<0.000000e+00> : vector<3x2x8xf32>
      %102 = vector.multi_reduction <add>, %101, %cst_81 [3] : vector<3x2x8x128xf32> to vector<3x2x8xf32>
      %cst_82 = arith.constant dense<0.000000e+00> : vector<3x2xf32>
      %103 = vector.multi_reduction <add>, %102, %cst_82 [2] : vector<3x2x8xf32> to vector<3x2xf32>
      %104 = vector.shape_cast %103 : vector<3x2xf32> to vector<1x1x3x2xf32>
      %c0_83 = arith.constant 0 : index
      %c0_84 = arith.constant 0 : index
      %c0_85 = arith.constant 0 : index
      %c0_86 = arith.constant 0 : index
      %105 = vector.load %arg5[%c0_83, %c0_84, %c0_85, %c0_86] : memref<1x1x3x2xf32, #tpu.memory_space<vmem>>, vector<1x1x3x2xf32>
      tpu.vector_store %arg5[%c0_83, %c0_84, %c0_85, %c0_86], %104 {strides = array<i32>} : memref<1x1x3x2xf32, #tpu.memory_space<vmem>>, vector<1x1x3x2xf32>,
    } else {
    }
    return
  }
  func.func @transform_0(%arg0: i32, %arg1: i32, %arg2: i32) -> (i32, i32, i32, i32) {
    %c1_i32 = arith.constant 1 : i32
    %0 = arith.muli %arg0, %c1_i32 : i32
    %1 = arith.addi %0, %arg2 : i32
    %c0_i32 = arith.constant 0 : i32
    %2 = arith.minsi %1, %c0_i32 : i32
    %c0_i32_0 = arith.constant 0 : i32
    %c0_i32_1 = arith.constant 0 : i32
    %c0_i32_2 = arith.constant 0 : i32
    return %arg1, %c0_i32_0, %2, %c0_i32_1 : i32, i32, i32, i32
  }
  func.func @transform_1(%arg0: i32, %arg1: i32, %arg2: i32) -> (i32, i32, i32) {
    %c1_i32 = arith.constant 1 : i32
    %0 = arith.muli %arg0, %c1_i32 : i32
    %1 = arith.addi %0, %arg2 : i32
    %c0_i32 = arith.constant 0 : i32
    %2 = arith.minsi %1, %c0_i32 : i32
    %c0_i32_0 = arith.constant 0 : i32
    %c0_i32_1 = arith.constant 0 : i32
    return %arg1, %2, %c0_i32_0 : i32, i32, i32
  }
  func.func @transform_2(%arg0: i32, %arg1: i32, %arg2: i32) -> (i32, i32, i32, i32) {
    %c0_i32 = arith.constant 0 : i32
    %c0_i32_0 = arith.constant 0 : i32
    %c0_i32_1 = arith.constant 0 : i32
    return %arg0, %arg1, %c0_i32, %c0_i32_0 : i32, i32, i32, i32
  }
}

</mosaic_0001>

<llo_original>
// kernel: tpu_custom_call.1
$region0: #{tpu_custom_call.1}
  #allocation0 [shape = 'u32[]', space=smem, size = 0x4, offset = 0x4, fixed_abs, tag = 'smem constant byte address 0x4 - core index']
  #allocation1 [shape = 'u32[144,128]{1,0:T(1,128)}', space=vmem, size = 0x12000, scoped, tag = 'internal scratch']
  #allocation2 [shape = 'f32[3,2,8,128]{3,2,1,0:T(8,128)}', space=vmem, size = 0x6000, scoped, tag = 'scratch operand']
  %s0 = inlined_call_operand.hbm [shape: f32[2,2,32,128], index: 0, kind: input, shape index: {}]
  %s1 = inlined_call_operand.hbm [shape: s8[2,32,128], index: 1, kind: input, shape index: {}]
  %s2 = inlined_call_operand.vmem [shape: f32[1,2,3,2], index: 2, kind: output, shape index: {}]
  %s3 = sld [smem:[#allocation0]]
  $region57: #{tpu_custom_call.1} parent=0
    _
  %s5 = ssub.s32 1, %s3
  %s6 = scalar_select 0, %s5, %s3
  $region1: #{tpu_custom_call.1} parent=0
    #allocation3 [shape = 'u8[65536]{0}', space=vmem, size = 0x10000, scoped, tag = 'input window, operand 0']
    #allocation4 [shape = 's32[2]{0}', space=sflag, size = 0x8, scoped, tag = 'scoped memory for tpu_custom_call.1']
    #allocation5 [shape = 'u8[8192]{0}', space=vmem, size = 0x2000, scoped, tag = 'input window, operand 1']
    #allocation6 [shape = 's32[2]{0}', space=sflag, size = 0x8, scoped, tag = 'scoped memory for tpu_custom_call.1']
    %7 = vsyncpa [#allocation4], 0
    %s8 = scalar_lea.sflag [#allocation4], 1
    %9 = vsyncpa %s8, 0
    %10 = vsyncpa [#allocation6], 0
    %s11 = scalar_lea.sflag [#allocation6], 1
    %12 = vsyncpa %s11, 0
    loop: start=0, step=1, limit=4
    $region2: #{tpu_custom_call.1} parent=1 // loop_pre_header
      _
    $region3: #{tpu_custom_call.1} parent=1 // loop_header
      %s14 = sphi 0, %s18
      %p15 = scmp.ge.s32.totalorder %s14, 4
      %s21 = sphi 0, %s40
      %s22 = sphi 0, %s36
      %s23 = sphi 0, %s32
      %s24 = sphi 0, %s21
      %s25 = sphi 0, %s22
      %s26 = sphi 0, %s23
      %s27 = sphi 0, %s24
      %s28 = sphi 0, %s25
      %s29 = sphi 0, %s26
      %s51 = sphi 0, %s53
      %s54 = sphi 0, %s51
      %s55 = sphi 0, %s54
      %s71 = sphi 0, %s55
      %s85 = sphi 0, %s87
      %s88 = sphi 0, %s85
      %s89 = sphi 0, %s88
      %s105 = sphi 0, %s89
      %s113 = sphi 0, %s115
      %s116 = sphi 0, %s113
      %s117 = sphi 0, %s116
      %s133 = sphi 0, %s117
    $region4: #{tpu_custom_call.1} parent=1 // loop_header_branch
      %17 = sbr.rel (%p15) target = $region8
    $region5: #{tpu_custom_call.1} parent=1 // loop_body
      %s19 = ssub.s32 %s14, 1
      %s20 = ssub.s32 %s14, 2
      %s30 = sadd.s32 1, %s23
      %p31 = scmp.ge.s32.totalorder %s30, 1
      %s32 = scalar_select %p31, 0, %s30
      %s33 = sadd.s32 1, %s22
      %s34 = scalar_select %p31, %s33, %s22
      %p35 = scmp.ge.s32.totalorder %s34, 2
      %s36 = scalar_select %p35, 0, %s34
      %s37 = sadd.s32 1, %s21
      %s38 = scalar_select %p35, %s37, %s21
      %p39 = scmp.ge.s32.totalorder %s38, 1
      %s40 = scalar_select %p39, 0, %s38
      %s41 = sadd.s32 %s21, %s23
      %p42 = scmp.lt.s32.totalorder %s41, 0
      %s43 = scalar_select %p42, %s41, 0
      %s44 = sadd.s32 %s40, %s32
      %p45 = scmp.lt.s32.totalorder %s44, 0
      %s46 = scalar_select %p45, %s44, 0
      %s47 = ssub.s32 %s22, %s36
      %s48 = ssub.s32 %s43, %s46
      %s49 = sor.u32 %s47, %s48
      %p50 = scmp.eq.s32.totalorder %s49, 0
      %s52 = sadd.s32 %s51, 1
      %s53 = scalar_select %p50, %s51, %s52
      %p56 = pneg %p50
      %p57 = scmp.eq.s32.totalorder %s14, 1
      %p58 = por %p56, %p57
      %p59 = scmp.ne.s32.totalorder %s51, %s54
      %p60 = scmp.eq.s32.totalorder %s14, 0
      %p61 = por %p59, %p60
      %p62 = scmp.ne.s32.totalorder %s51, %s54
      %p63 = scmp.eq.s32.totalorder %s19, 1
      %p64 = por %p62, %p63
      %p65 = scmp.ne.s32.totalorder %s54, %s55
      %p66 = scmp.eq.s32.totalorder %s19, 0
      %p67 = por %p65, %p66
      %p68 = scmp.ne.s32.totalorder %s54, %s55
      %p69 = scmp.eq.s32.totalorder %s20, 1
      %p70 = por %p68, %p69
      %p72 = scmp.ne.s32.totalorder %s55, %s71
      %p73 = scmp.eq.s32.totalorder %s20, 0
      %p74 = por %p72, %p73
      %s75 = sadd.s32 %s21, %s23
      %p76 = scmp.lt.s32.totalorder %s75, 0
      %s77 = scalar_select %p76, %s75, 0
      %s78 = sadd.s32 %s40, %s32
      %p79 = scmp.lt.s32.totalorder %s78, 0
      %s80 = scalar_select %p79, %s78, 0
      %s81 = ssub.s32 %s22, %s36
      %s82 = ssub.s32 %s77, %s80
      %s83 = sor.u32 %s81, %s82
      %p84 = scmp.eq.s32.totalorder %s83, 0
      %s86 = sadd.s32 %s85, 1
      %s87 = scalar_select %p84, %s85, %s86
      %p90 = pneg %p84
      %p91 = scmp.eq.s32.totalorder %s14, 1
      %p92 = por %p90, %p91
      %p93 = scmp.ne.s32.totalorder %s85, %s88
      %p94 = scmp.eq.s32.totalorder %s14, 0
      %p95 = por %p93, %p94
      %p96 = scmp.ne.s32.totalorder %s85, %s88
      %p97 = scmp.eq.s32.totalorder %s19, 1
      %p98 = por %p96, %p97
      %p99 = scmp.ne.s32.totalorder %s88, %s89
      %p100 = scmp.eq.s32.totalorder %s19, 0
      %p101 = por %p99, %p100
      %p102 = scmp.ne.s32.totalorder %s88, %s89
      %p103 = scmp.eq.s32.totalorder %s20, 1
      %p104 = por %p102, %p103
      %p106 = scmp.ne.s32.totalorder %s89, %s105
      %p107 = scmp.eq.s32.totalorder %s20, 0
      %p108 = por %p106, %p107
      %s109 = ssub.s32 %s21, %s40
      %s110 = ssub.s32 %s22, %s36
      %s111 = sor.u32 %s109, %s110
      %p112 = scmp.eq.s32.totalorder %s111, 0
      %s114 = sadd.s32 %s113, 1
      %s115 = scalar_select %p112, %s113, %s114
      %p118 = pneg %p112
      %p119 = scmp.eq.s32.totalorder %s14, 1
      %p120 = por %p118, %p119
      %p121 = scmp.ne.s32.totalorder %s113, %s116
      %p122 = scmp.eq.s32.totalorder %s14, 0
      %p123 = por %p121, %p122
      %p124 = scmp.ne.s32.totalorder %s113, %s116
      %p125 = scmp.eq.s32.totalorder %s19, 1
      %p126 = por %p124, %p125
      %p127 = scmp.ne.s32.totalorder %s116, %s117
      %p128 = scmp.eq.s32.totalorder %s19, 0
      %p129 = por %p127, %p128
      %p130 = scmp.ne.s32.totalorder %s116, %s117
      %p131 = scmp.eq.s32.totalorder %s20, 1
      %p132 = por %p130, %p131
      %p134 = scmp.ne.s32.totalorder %s117, %s133
      %p135 = scmp.eq.s32.totalorder %s20, 0
      %p136 = por %p134, %p135
      %p137 = scmp.le.s32.totalorder 1, %s14
      %p138 = scmp.lt.s32.totalorder %s14, 3
      %p139 = pnand %p137, %p138
      %p140 = pneg %p139
      // Predicated region
      $region9: #{tpu_custom_call.1} parent=5 // pred_check
        _
      $region10: #{tpu_custom_call.1} parent=5 // pred_check_branch
        %142 = sbr.rel (%p139) target = $region12
      $region11: #{tpu_custom_call.1} parent=5 // pred_region
        %s143 = ssub.s32 %s14, 1
      $region12: #{tpu_custom_call.1} parent=5 // pred_fallthru
        _
      %p144 = scmp.lt.s32.totalorder %s14, 2
      // Predicated region
      $region13: #{tpu_custom_call.1} parent=5 // pred_check
        %p145 = pneg %p144
      $region14: #{tpu_custom_call.1} parent=5 // pred_check_branch
        %147 = sbr.rel (%p145) target = $region16
      $region15: #{tpu_custom_call.1} parent=5 // pred_region
        // Predicated region
        $region17: #{tpu_custom_call.1} parent=15 // pred_check
          %p148 = pneg %p61
        $region18: #{tpu_custom_call.1} parent=15 // pred_check_branch
          %150 = sbr.rel (%p148) target = $region20
        $region19: #{tpu_custom_call.1} parent=15 // pred_region
          %s151 = sand.u32 %s51, 1
          %s152 = scalar_lea.sflag [#allocation4], %s151
          %s153 = sand.u32 %s51, 1
          %s154 = smul.addr %s153, 64
          %s155 = scalar_lea.vmem [#allocation3], %s154
          %s156 = sadd.s32 %s21, %s23
          %p157 = scmp.lt.s32.totalorder %s156, 0
          %s158 = scalar_select %p157, %s156, 0
          %s159 = smul.u32 4, %s158
          %s161 = ssub.s32 1024, 1024
          %162 = vsyncadd %s152, %s161
          %s163 = smul.addr %s22, 8
          %s164 = sadd.s32 %s159, %s163
          %s165 = smul.addr %s164, 128
          %s166 = scalar_lea.hbm %s0, %s165
          %s167 = sshll.u32 %s155, 4
          %s168 = int_to_ptr.vmem [resolvable:$true] %s167
          %173 = dma.hbm_to_vmem [thread:$0]  %s166, 1024, %s168, %s152, 128, 128, 8
        $region20: #{tpu_custom_call.1} parent=15 // pred_fallthru
          _
        // Predicated region
        $region21: #{tpu_custom_call.1} parent=15 // pred_check
          %p174 = pneg %p95
        $region22: #{tpu_custom_call.1} parent=15 // pred_check_branch
          %176 = sbr.rel (%p174) target = $region24
        $region23: #{tpu_custom_call.1} parent=15 // pred_region
          %s177 = sand.u32 %s85, 1
          %s178 = scalar_lea.sflag [#allocation6], %s177
          %s179 = sand.u32 %s85, 1
          %s180 = smul.addr %s179, 8
          %s181 = scalar_lea.vmem [#allocation5], %s180
          %s182 = sadd.s32 %s21, %s23
          %p183 = scmp.lt.s32.totalorder %s182, 0
          %s184 = scalar_select %p183, %s182, 0
          %s186 = ssub.s32 128, 128
          %187 = vsyncadd %s178, %s186
          %s188 = sadd.s32 %s184, %s22
          %s189 = smul.addr %s188, 128
          %s190 = scalar_lea.hbm %s1, %s189
          %s192 = sshll.u32 %s181, 4
          %s193 = int_to_ptr.vmem [resolvable:$true] %s192
          %195 = dma.hbm_to_vmem [thread:$0]  %s190, 128, %s193, %s178
        $region24: #{tpu_custom_call.1} parent=15 // pred_fallthru
          _
      $region16: #{tpu_custom_call.1} parent=5 // pred_fallthru
        _
      %p196 = scmp.le.s32.totalorder 1, %s14
      %p197 = scmp.lt.s32.totalorder %s14, 3
      %p198 = pnand %p196, %p197
      %p199 = pneg %p198
      // Predicated region
      $region25: #{tpu_custom_call.1} parent=5 // pred_check
        _
      $region26: #{tpu_custom_call.1} parent=5 // pred_check_branch
        %201 = sbr.rel (%p198) target = $region28
      $region27: #{tpu_custom_call.1} parent=5 // pred_region
        %s202 = ssub.s32 %s14, 1
        %s203 = sand.u32 %s54, 1
        %s204 = scalar_lea.sflag [#allocation4], %s203
        %s205 = sand.u32 %s54, 1
        %s206 = smul.addr %s205, 64
        %s207 = scalar_lea.vmem [#allocation3], %s206
        // Predicated region
        $region29: #{tpu_custom_call.1} parent=27 // pred_check
          %p208 = pneg %p67
        $region30: #{tpu_custom_call.1} parent=27 // pred_check_branch
          %210 = sbr.rel (%p208) target = $region32
        $region31: #{tpu_custom_call.1} parent=27 // pred_region
          %211 = dma.done %s204, 1024
        $region32: #{tpu_custom_call.1} parent=27 // pred_fallthru
          _
        %s212 = sand.u32 %s88, 1
        %s213 = scalar_lea.sflag [#allocation6], %s212
        %s214 = sand.u32 %s88, 1
        %s215 = smul.addr %s214, 8
        %s216 = scalar_lea.vmem [#allocation5], %s215
        // Predicated region
        $region33: #{tpu_custom_call.1} parent=27 // pred_check
          %p217 = pneg %p101
        $region34: #{tpu_custom_call.1} parent=27 // pred_check_branch
          %219 = sbr.rel (%p217) target = $region36
        $region35: #{tpu_custom_call.1} parent=27 // pred_region
          %220 = dma.done %s213, 128
        $region36: #{tpu_custom_call.1} parent=27 // pred_fallthru
          _
        %s221 = sand.u32 %s54, 1
        %s222 = scalar_lea.sflag [#allocation4], %s221
        %s223 = sand.u32 %s54, 1
        %s224 = smul.addr %s223, 64
        %s225 = scalar_lea.vmem [#allocation3], %s224
        %p226 = pneg %p67
        %p227 = pneg %p64
        %s228 = sand.u32 %s88, 1
        %s229 = scalar_lea.sflag [#allocation6], %s228
        %s230 = sand.u32 %s88, 1
        %s231 = smul.addr %s230, 8
        %s232 = scalar_lea.vmem [#allocation5], %s231
        %p233 = pneg %p101
        %p234 = pneg %p98
        %p235 = pneg %p129
        %p236 = pneg %p126
        %p237 = scmp.lt.s32.totalorder %s24, 0
        %s238 = scalar_select %p237, %s24, 0
        %p239 = scmp.lt.s32.totalorder %s25, 1
        %s240 = scalar_select %p239, %s25, 1
        %s241 = smul.addr %s238, 2
        %s242 = sadd.s32 %s240, %s241
        %s243 = smul.addr %s242, 4
        %s244 = scalar_lea.vmem %s2, %s243
        %s245 = sadd.s32 %s24, %s26
        %p246 = scmp.lt.s32.totalorder %s245, 0
        %s247 = scalar_select %p246, %s245, 0
        %s248 = smul.u32 4, %s247
        %s249 = sadd.s32 %s24, %s26
        %p250 = scmp.lt.s32.totalorder %s249, 0
        %s251 = scalar_select %p250, %s249, 0
        %p252 = scmp.lt.s32.totalorder %s24, 0
        %s253 = scalar_select %p252, %s24, 0
        %p254 = scmp.lt.s32.totalorder %s25, 1
        %s255 = scalar_select %p254, %s25, 1
        %s256 = smul.addr %s253, 2
        %s257 = sadd.s32 %s255, %s256
        %s258 = smul.addr %s257, 4
        %s259 = scalar_lea.vmem %s2, %s258
        %p260 = scmp.eq.s32.totalorder %s26, 0
        // Predicated region
        $region37: #{tpu_custom_call.1} parent=27 // pred_check
          %p261 = pneg %p260
        $region38: #{tpu_custom_call.1} parent=27 // pred_check_branch
          %263 = sbr.rel (%p261) target = $region40
        $region39: #{tpu_custom_call.1} parent=27 // pred_region
          %264 = vst [vmem:[#allocation2] sm:$0xff] 0.0
          %265 = vst [vmem:[#allocation2 + $0x8] sm:$0xff] 0.0
          %266 = vst [vmem:[#allocation2 + $0x10] sm:$0xff] 0.0
          %267 = vst [vmem:[#allocation2 + $0x18] sm:$0xff] 0.0
          %268 = vst [vmem:[#allocation2 + $0x20] sm:$0xff] 0.0
          %269 = vst [vmem:[#allocation2 + $0x28] sm:$0xff] 0.0
        $region40: #{tpu_custom_call.1} parent=27 // pred_fallthru
          _
        %s270 = sadd.s32 %s24, %s26
        %v271 = vlaneseq
        %v272 = vshrl.u32 %v271, 7
        %v273 = vadd.s32 %v272, 8
        %v274 = vadd.s32 %v272, 16
        %v275 = vadd.s32 %v272, 24
        %v276 = vlaneseq
        %v277 = vand.u32 %v276, 127
        %s278 = smul.u32 %s270, 32
        %v279 = vstv %s278
        %v280 = vadd.s32 %v279, %v272
        %v281 = vadd.s32 %v279, %v273
        %v282 = vadd.s32 %v279, %v274
        %v283 = vadd.s32 %v279, %v275
        %v284 = vmul.u32 %v280, 128
        %v285 = vmul.u32 %v281, 128
        %v286 = vmul.u32 %v282, 128
        %v287 = vmul.u32 %v283, 128
        %v288 = vadd.s32 %v284, %v277
        %v289 = vadd.s32 %v285, %v277
        %v290 = vadd.s32 %v286, %v277
        %v291 = vadd.s32 %v287, %v277
        %vm292 = vcmp.lt.s32.totalorder %v288, 256
        %vm293 = vcmp.lt.s32.totalorder %v289, 256
        %vm294 = vcmp.lt.s32.totalorder %v290, 256
        %vm295 = vcmp.lt.s32.totalorder %v291, 256
        %v296 = vld [vmem:[%s216] sm:$0xff]
        %v297 = vunpack.c.0.s8 %v296
        %v298 = vunpack.c.1.s8 %v296
        %v299 = vunpack.c.2.s8 %v296
        %v300 = vunpack.c.3.s8 %v296
        %v301 = vld [vmem:[%s207] sm:$0xff]
        %v302 = vld [vmem:[%s207 + $0x8] sm:$0xff]
        %v303 = vld [vmem:[%s207 + $0x10] sm:$0xff]
        %v304 = vld [vmem:[%s207 + $0x18] sm:$0xff]
        %s305 = scalar_lea.vmem %s207, 32 [#allocation3]
        %v306 = vld [vmem:[%s305] sm:$0xff]
        %v307 = vld [vmem:[%s305 + $0x8] sm:$0xff]
        %v308 = vld [vmem:[%s305 + $0x10] sm:$0xff]
        %v309 = vld [vmem:[%s305 + $0x18] sm:$0xff]
        %v310 = vsub.f32 %v301, %v306
        %v311 = vsub.f32 %v302, %v307
        %v312 = vsub.f32 %v303, %v308
        %v313 = vsub.f32 %v304, %v309
        %v314 = vmul.f32 %v310, 1.442695
        %v315 = vpow.pop %v314
        %v316 = vmul.f32 %v311, 1.442695
        %v317 = vpow.pop %v316
        %v318 = vmul.f32 %v312, 1.442695
        %v319 = vpow.pop %v318
        %v320 = vmul.f32 %v313, 1.442695
        %v321 = vpow.pop %v320
        %v322 = vadd.f32 %v315, 1.0
        %v323 = vadd.f32 %v317, 1.0
        %v324 = vadd.f32 %v319, 1.0
        %v325 = vadd.f32 %v321, 1.0
        %v326 = vrcp.pop %v322
        %v327 = vmul.f32 1.0, %v326
        %v328 = vrcp.pop %v323
        %v329 = vmul.f32 1.0, %v328
        %v330 = vrcp.pop %v324
        %v331 = vmul.f32 1.0, %v330
        %v332 = vrcp.pop %v325
        %v333 = vmul.f32 1.0, %v332
        %v334 = vsub.f32 1.0, %v327
        %v335 = vsub.f32 1.0, %v329
        %v336 = vsub.f32 1.0, %v331
        %v337 = vsub.f32 1.0, %v333
        %vm338 = vcmp.eq.s32.totalorder %v297, 0
        %vm339 = vcmp.eq.s32.totalorder %v298, 0
        %vm340 = vcmp.eq.s32.totalorder %v299, 0
        %vm341 = vcmp.eq.s32.totalorder %v300, 0
        %vm342 = vmand %vm292, %vm338
        %vm343 = vmand %vm293, %vm339
        %vm344 = vmand %vm294, %vm340
        %vm345 = vmand %vm295, %vm341
        %v346 = vld [vmem:[#allocation2] sm:$0xff]
        %v347 = vsel %vm342, %v334, 0.0
        %v348 = vsel %vm343, %v335, 0.0
        %v349 = vsel %vm344, %v336, 0.0
        %v350 = vsel %vm345, %v337, 0.0
        %v351 = vadd.f32 %v347, %v348
        %v352 = vadd.f32 %v351, %v349
        %v353 = vadd.f32 %v352, %v350
        %v354 = vadd.f32 %v346, %v353
        %355 = vst [vmem:[#allocation2] sm:$0xff] %v354
        %s356 = scalar_lea.vmem [#allocation2], 16
        %v357 = vld [vmem:[%s356] sm:$0xff]
        %v358 = vsel %vm292, %v334, 0.0
        %v359 = vsel %vm293, %v335, 0.0
        %v360 = vsel %vm294, %v336, 0.0
        %v361 = vsel %vm295, %v337, 0.0
        %v362 = vadd.f32 %v358, %v359
        %v363 = vadd.f32 %v362, %v360
        %v364 = vadd.f32 %v363, %v361
        %v365 = vadd.f32 %v357, %v364
        %366 = vst [vmem:[%s356] sm:$0xff] %v365
        %s367 = scalar_lea.vmem [#allocation2], 32
        %v368 = vld [vmem:[%s367] sm:$0xff]
        %v369 = vsel %vm342, 1.0, 0.0
        %v370 = vsel %vm343, 1.0, 0.0
        %v371 = vsel %vm344, 1.0, 0.0
        %v372 = vsel %vm345, 1.0, 0.0
        %v373 = vadd.f32 %v369, %v370
        %v374 = vadd.f32 %v373, %v371
        %v375 = vadd.f32 %v374, %v372
        %v376 = vadd.f32 %v368, %v375
        %377 = vst [vmem:[%s367] sm:$0xff] %v376
        %vm378 = vcmp.eq.s32.totalorder %v297, 1
        %vm379 = vcmp.eq.s32.totalorder %v298, 1
        %vm380 = vcmp.eq.s32.totalorder %v299, 1
        %vm381 = vcmp.eq.s32.totalorder %v300, 1
        %vm382 = vmand %vm292, %vm378
        %vm383 = vmand %vm293, %vm379
        %vm384 = vmand %vm294, %vm380
        %vm385 = vmand %vm295, %vm381
        %s386 = scalar_lea.vmem [#allocation2], 8
        %v387 = vld [vmem:[%s386] sm:$0xff]
        %v388 = vsel %vm382, %v327, 0.0
        %v389 = vsel %vm383, %v329, 0.0
        %v390 = vsel %vm384, %v331, 0.0
        %v391 = vsel %vm385, %v333, 0.0
        %v392 = vadd.f32 %v388, %v389
        %v393 = vadd.f32 %v392, %v390
        %v394 = vadd.f32 %v393, %v391
        %v395 = vadd.f32 %v387, %v394
        %396 = vst [vmem:[%s386] sm:$0xff] %v395
        %s397 = scalar_lea.vmem [#allocation2], 24
        %v398 = vld [vmem:[%s397] sm:$0xff]
        %v399 = vsel %vm292, %v327, 0.0
        %v400 = vsel %vm293, %v329, 0.0
        %v401 = vsel %vm294, %v331, 0.0
        %v402 = vsel %vm295, %v333, 0.0
        %v403 = vadd.f32 %v399, %v400
        %v404 = vadd.f32 %v403, %v401
        %v405 = vadd.f32 %v404, %v402
        %v406 = vadd.f32 %v398, %v405
        %407 = vst [vmem:[%s397] sm:$0xff] %v406
        %s408 = scalar_lea.vmem [#allocation2], 40
        %v409 = vld [vmem:[%s408] sm:$0xff]
        %v410 = vsel %vm382, 1.0, 0.0
        %v411 = vsel %vm383, 1.0, 0.0
        %v412 = vsel %vm384, 1.0, 0.0
        %v413 = vsel %vm385, 1.0, 0.0
        %v414 = vadd.f32 %v410, %v411
        %v415 = vadd.f32 %v414, %v412
        %v416 = vadd.f32 %v415, %v413
        %v417 = vadd.f32 %v409, %v416
        %418 = vst [vmem:[%s408] sm:$0xff] %v417
        // Predicated region
        $region41: #{tpu_custom_call.1} parent=27 // pred_check
          %p419 = pneg %p260
        $region42: #{tpu_custom_call.1} parent=27 // pred_check_branch
          %421 = sbr.rel (%p419) target = $region44
        $region43: #{tpu_custom_call.1} parent=27 // pred_region
          %v422 = vld [vmem:[#allocation2] sm:$0xff]
          %v423 = vld [vmem:[#allocation2 + $0x8] sm:$0xff]
          %v424 = vld [vmem:[#allocation2 + $0x10] sm:$0xff]
          %v425 = vld [vmem:[#allocation2 + $0x18] sm:$0xff]
          %v426 = vld [vmem:[#allocation2 + $0x20] sm:$0xff]
          %v427 = vld [vmem:[#allocation2 + $0x28] sm:$0xff]
          %428 = vadd.xlane.f32.xlu0 %v422
          %v429 = vpop.xlane.xlu0 %428
          %430 = vadd.xlane.f32.xlu0 %v423
          %v431 = vpop.xlane.xlu0 %430
          %432 = vadd.xlane.f32.xlu0 %v424
          %v433 = vpop.xlane.xlu0 %432
          %434 = vadd.xlane.f32.xlu0 %v425
          %v435 = vpop.xlane.xlu0 %434
          %436 = vadd.xlane.f32.xlu0 %v426
          %v437 = vpop.xlane.xlu0 %436
          %438 = vadd.xlane.f32.xlu0 %v427
          %v439 = vpop.xlane.xlu0 %438
          %v446 = vlaneseq
          %v447 = vshrl.u32 %v446, 7
          %v448 = vsub.s32 %v277, %v447
          %v449 = vrot.slane %v429, %v448
          %v450 = vlaneseq
          %v451 = vshrl.u32 %v450, 7
          %v452 = vsub.s32 %v277, %v451
          %v453 = vrot.slane %v431, %v452
          %v454 = vlaneseq
          %v455 = vshrl.u32 %v454, 7
          %v456 = vsub.s32 %v277, %v455
          %v457 = vrot.slane %v433, %v456
          %v458 = vlaneseq
          %v459 = vshrl.u32 %v458, 7
          %v460 = vsub.s32 %v277, %v459
          %v461 = vrot.slane %v435, %v460
          %v462 = vlaneseq
          %v463 = vshrl.u32 %v462, 7
          %v464 = vsub.s32 %v277, %v463
          %v465 = vrot.slane %v437, %v464
          %v466 = vlaneseq
          %v467 = vshrl.u32 %v466, 7
          %v468 = vsub.s32 %v277, %v467
          %v469 = vrot.slane %v439, %v468
          %vm470 = vcmask 1041409
          %v471 = vsel %vm470, %v453, %v449
          %v472 = vsel %vm470, %v461, %v457
          %v473 = vsel %vm470, %v469, %v465
          %vm477 = vcmask 58368
          %v478 = vsel %vm477, %v471, 0.0
          %479 = vadd.xlane.f32.xlu0 %v478
          %v480 = vpop.xlane.xlu0 %479
          %v481 = vsel %vm477, %v472, 0.0
          %482 = vadd.xlane.f32.xlu0 %v481
          %v483 = vpop.xlane.xlu0 %482
          %v484 = vsel %vm477, %v473, 0.0
          %485 = vadd.xlane.f32.xlu0 %v484
          %v486 = vpop.xlane.xlu0 %485
          %v490 = vlaneseq
          %v491 = vshrl.u32 %v490, 7
          %v492 = vsub.s32 %v277, %v491
          %v493 = vrot.slane %v480, %v492
          %v494 = vlaneseq
          %v495 = vshrl.u32 %v494, 7
          %v496 = vsub.s32 %v277, %v495
          %v497 = vrot.slane %v483, %v496
          %v498 = vlaneseq
          %v499 = vshrl.u32 %v498, 7
          %v500 = vsub.s32 %v277, %v499
          %v501 = vrot.slane %v486, %v500
          %v502 = vsel %vm470, %v497, %v493
          %vm503 = vcmask 1042434
          %v504 = vsel %vm503, %v501, %v502
          %vm506 = vcmask 10240
          %507 = vst.msk [vmem:[%s259] sm:$0x7] %vm506, %v504
        $region44: #{tpu_custom_call.1} parent=27 // pred_fallthru
          _
        %p508 = scmp.lt.s32.totalorder %s24, 0
        %s509 = scalar_select %p508, %s24, 0
        %p510 = scmp.lt.s32.totalorder %s25, 1
        %s511 = scalar_select %p510, %s25, 1
        %s512 = smul.addr %s509, 2
        %s513 = sadd.s32 %s511, %s512
        %s514 = smul.addr %s513, 4
        %s515 = scalar_lea.vmem %s2, %s514
        // Predicated region
        $region45: #{tpu_custom_call.1} parent=27 // pred_check
          %p516 = pneg %p126
        $region46: #{tpu_custom_call.1} parent=27 // pred_check_branch
          %518 = sbr.rel (%p516) target = $region48
        $region47: #{tpu_custom_call.1} parent=27 // pred_region
          _
        $region48: #{tpu_custom_call.1} parent=27 // pred_fallthru
          _
      $region28: #{tpu_custom_call.1} parent=5 // pred_fallthru
        _
      %p519 = scmp.le.s32.totalorder 2, %s14
      // Predicated region
      $region49: #{tpu_custom_call.1} parent=5 // pred_check
        %p520 = pneg %p519
      $region50: #{tpu_custom_call.1} parent=5 // pred_check_branch
        %522 = sbr.rel (%p520) target = $region52
      $region51: #{tpu_custom_call.1} parent=5 // pred_region
        %s523 = ssub.s32 %s14, 2
        // Predicated region
        $region53: #{tpu_custom_call.1} parent=51 // pred_check
          %p524 = pneg %p132
        $region54: #{tpu_custom_call.1} parent=51 // pred_check_branch
          %526 = sbr.rel (%p524) target = $region56
        $region55: #{tpu_custom_call.1} parent=51 // pred_region
          %p527 = scmp.lt.s32.totalorder %s27, 0
          %s528 = scalar_select %p527, %s27, 0
          %p529 = scmp.lt.s32.totalorder %s28, 1
          %s530 = scalar_select %p529, %s28, 1
          %s531 = smul.addr %s528, 2
          %s532 = sadd.s32 %s530, %s531
          %s533 = smul.addr %s532, 4
          %s534 = scalar_lea.vmem %s2, %s533
        $region56: #{tpu_custom_call.1} parent=51 // pred_fallthru
          _
      $region52: #{tpu_custom_call.1} parent=5 // pred_fallthru
        _
    $region6: #{tpu_custom_call.1} parent=1 // loop_footer
      %s18 = sadd.s32 1, %s14
    $region7: #{tpu_custom_call.1} parent=1 // loop_footer_branch
      %13 = sbr.rel target = $region3
    $region8: #{tpu_custom_call.1} parent=1 // loop_exit
      _
    %535 = vsyncpa [#allocation4], 1
    %s536 = scalar_lea.sflag [#allocation4], 1
    %537 = vsyncpa %s536, 1
    %538 = vsyncpa [#allocation6], 1
    %s539 = scalar_lea.sflag [#allocation6], 1
    %540 = vsyncpa %s539, 1

</llo_original>
